<compile_context>
chip_gen: v7x
topology: tpu7x:2x2x1
jax: 0.10.0
libtpu: 0.0.40
codegen_flags: <defaults>
</compile_context>

<pallas_src>
import functools

import jax
import jax.numpy as jnp
from jax.experimental import pallas as pl
from jax.experimental.pallas import tpu as pltpu


def _round_up(v, m):
    return ((v + m - 1) // m) * m


# ---------------------------------------------------------------------------
# Kernels
# ---------------------------------------------------------------------------
def _linear_tanh_acc_kernel(x_ref, w_ref, b_ref, o_ref, acc_ref):
    """Multi-K-step path: (tm, tn) output tile accumulated over the K axis.

    x_ref  : (tm, tk)  activation tile
    w_ref  : (tk, tn)  weight tile, K-major [in, out] layout (no transpose)
    b_ref  : (1,  tn)  f32 bias tile
    o_ref  : (tm, tn)  output tile
    acc_ref: (tm, tn)  f32 VMEM accumulator, persistent across K steps
    """
    k = pl.program_id(2)

    @pl.when(k == 0)
    def _():
        # Fold the bias into the accumulator init; epilogue becomes pure tanh.
        acc_ref[...] = jnp.broadcast_to(b_ref[...], acc_ref.shape)

    acc_ref[...] += jnp.dot(x_ref[...], w_ref[...],
                            preferred_element_type=jnp.float32)

    @pl.when(k == pl.num_programs(2) - 1)
    def _():
        o_ref[...] = jnp.tanh(acc_ref[...]).astype(o_ref.dtype)


def _linear_tanh_single_k_kernel(x_ref, w_ref, b_ref, o_ref):
    """Single-K-tile fast path (2-D grid, no scratch accumulator)."""
    acc = jnp.dot(x_ref[...], w_ref[...], preferred_element_type=jnp.float32)
    o_ref[...] = jnp.tanh(acc + b_ref[...]).astype(o_ref.dtype)


# ---------------------------------------------------------------------------
# Wrapper / factory
# ---------------------------------------------------------------------------
def make_layer_interface_forward(weights, bias, *, tm=512, tn=512, tk=1024,
                                 compute_dtype=jnp.float32):
    """One-time weight preparation + a jitted forward closure.

    Args:
      weights: [out_features, in_features]  (PyTorch convention)
      bias:    [out_features]
      compute_dtype: dtype of the matmul operands (f32 accumulation regardless).
                     Set to jnp.bfloat16 for ~3-4x MXU speedup on v6e/v7x
                     (numerics decision; default f32).
    Returns:
      forward(x) -> tanh(x @ weights.T + bias),  x: [B, in_features]
    """
    out_features, in_features = weights.shape
    assert bias.shape == (out_features,)

    # ---- Tile planning (N/K known now; M depends on the batch at call time).
    n_align = 256 if out_features > 128 else 128  # fill the 256-wide MXU
    tn = min(tn, _round_up(out_features, n_align))
    tk = min(tk, _round_up(in_features, 128))
    Np = _round_up(out_features, tn)
    Kp = _round_up(in_features, tk)

    # ---- One-time weight prep: [out, in] -> K-major [in, out], zero-padded,
    #      cast to compute dtype.  Amortized to zero across forward calls.
    w_kn = weights.T.astype(compute_dtype)
    if (Kp, Np) != (in_features, out_features):
        w_kn = jnp.pad(w_kn, ((0, Kp - in_features), (0, Np - out_features)))
    b_pn = bias.astype(jnp.float32)
    if Np != out_features:
        b_pn = jnp.pad(b_pn, (0, Np - out_features))
    b_pn = b_pn.reshape(1, Np)

    tm_default = tm

    @jax.jit
    def forward(x):
        B, in_f = x.shape
        assert in_f == in_features
        out_dtype = x.dtype

        tm_ = min(tm_default, _round_up(B, 8))
        Mp = _round_up(B, tm_)

        # Keep >= 2 parallel M x N tiles when N allows, so both v7x
        # TensorCores get work even for small batches.
        tn_ = tn
        if (Mp // tm_) * (Np // tn_) == 1 and tn_ >= 256:
            tn_ //= 2

        # Pad x only when actually ragged (zeros are inert in the contraction).
        x_p = x.astype(compute_dtype)
        if (Mp, Kp) != (B, in_features):
            x_p = jnp.pad(x_p, ((0, Mp - B), (0, Kp - in_features)))

        n_k = Kp // tk
        grid_mn = (Mp // tm_, Np // tn_)

        # VMEM budget: double-buffered inputs + output + accumulator, with
        # headroom, clamped to 48 MiB (safe on v7x's 64 MiB per-TC VMEM).
        tile_bytes = 4 * (2 * (tm_ * tk + tk * tn_ + tn_) + 3 * tm_ * tn_)
        vmem_limit = int(min(max(2 * tile_bytes, 32 * 1024 * 1024),
                             48 * 1024 * 1024))

        cost = pl.CostEstimate(
            flops=2 * Mp * Kp * Np,
            transcendentals=Mp * Np,
            # Account for the Np/tn_ re-reads of x and Mp/tm_ re-reads of W.
            bytes_accessed=4 * (Mp * Kp * (Np // tn_)
                                + Kp * Np * (Mp // tm_)
                                + Mp * Np),
        )

        if n_k == 1:
            # Fast path: whole K fits one tile -> no accumulator round-trips.
            out_p = pl.pallas_call(
                _linear_tanh_single_k_kernel,
                out_shape=jax.ShapeDtypeStruct((Mp, Np), out_dtype),
                grid_spec=pltpu.PrefetchScalarGridSpec(
                    num_scalar_prefetch=0,
                    grid=grid_mn,
                    in_specs=[
                        pl.BlockSpec((tm_, tk), lambda i, j: (i, 0)),   # x
                        pl.BlockSpec((tk, tn_), lambda i, j: (0, j)),   # W [K,N]
                        pl.BlockSpec((1, tn_), lambda i, j: (0, j)),    # bias
                    ],
                    out_specs=pl.BlockSpec((tm_, tn_), lambda i, j: (i, j)),
                ),
                compiler_params=pltpu.CompilerParams(
                    dimension_semantics=("parallel", "parallel"),
                    vmem_limit_bytes=vmem_limit,
                ),
                cost_estimate=cost,
            )(x_p, w_kn, b_pn)
        else:
            out_p = pl.pallas_call(
                _linear_tanh_acc_kernel,
                out_shape=jax.ShapeDtypeStruct((Mp, Np), out_dtype),
                grid_spec=pltpu.PrefetchScalarGridSpec(
                    num_scalar_prefetch=0,
                    grid=grid_mn + (n_k,),
                    in_specs=[
                        pl.BlockSpec((tm_, tk), lambda i, j, k: (i, k)),  # x
                        pl.BlockSpec((tk, tn_), lambda i, j, k: (k, j)),  # W [K,N]
                        pl.BlockSpec((1, tn_), lambda i, j, k: (0, j)),   # bias
                    ],
                    out_specs=pl.BlockSpec((tm_, tn_), lambda i, j, k: (i, j)),
                    scratch_shapes=[pltpu.VMEM((tm_, tn_), jnp.float32)],
                ),
                compiler_params=pltpu.CompilerParams(
                    dimension_semantics=("parallel", "parallel", "arbitrary"),
                    vmem_limit_bytes=vmem_limit,
                ),
                cost_estimate=cost,
            )(x_p, w_kn, b_pn)

        if (Mp, Np) != (B, out_features):
            out_p = out_p[:B, :out_features]
        return out_p

    return forward


def layer_interface_forward(x, weights, bias, **kwargs):
    """Convenience single-shot API (prepares weights on every call)."""
    return make_layer_interface_forward(weights, bias, **kwargs)(x)


# ---------------------------------------------------------------------------
# Parameter init matching LayerInterface.__init__ (orthogonal, zero bias,
# per-row mean subtraction of the weights).
# ---------------------------------------------------------------------------
def init_layer_interface_params(key, in_features, out_features):
    gain = jnp.sqrt(6.0 / (in_features + out_features))
    ortho = jax.nn.initializers.orthogonal(scale=gain)
    weights = ortho(key, (out_features, in_features), jnp.float32)
    weights = weights - jnp.mean(weights, axis=1, keepdims=True)
    bias = jnp.zeros((out_features,), jnp.float32)
    return weights, bias


if __name__ == "__main__":
    B = 8
    in_features = 32
    out_features = 16

    key = jax.random.PRNGKey(0)
    k_w, k_x = jax.random.split(key)

    weights, bias = init_layer_interface_params(k_w, in_features, out_features)
    x = jax.random.normal(k_x, (B, in_features), dtype=jnp.float32)

    # Prepare weights once, reuse the closure across calls.
    forward = make_layer_interface_forward(weights, bias)
    out = forward(x)
    out = jax.block_until_ready(out)

    # Sanity check against a plain-JAX reference of the same forward.
    ref = jnp.tanh(x @ weights.T + bias[None, :])
    assert out.shape == (B, out_features)
    assert jnp.allclose(out, ref, atol=1e-5, rtol=1e-5)

    # TODO(synk): backward/autograd helpers (compute_bp_update, jacobians) and
    # logging utilities are training-time host-side code, not part of forward.
    print("KERNEL_OK")
</pallas_src>

<mosaic_0001>
module attributes {stable_mosaic.version = 11 : i64} {
  func.func @_linear_tanh_single_k_kernel(%arg0: i32, %arg1: i32, %arg2: memref<8x128xf32, #tpu.memory_space<vmem>>, %arg3: memref<128x128xf32, #tpu.memory_space<vmem>>, %arg4: memref<1x128xf32, #tpu.memory_space<vmem>>, %arg5: memref<8x128xf32, #tpu.memory_space<vmem>>) attributes {dimension_semantics = [#tpu.dimension_semantics<parallel>, #tpu.dimension_semantics<parallel>], iteration_bounds = array<i64: 1, 1>, scalar_prefetch = 0 : i64, scratch_operands = 0 : i64, tpu.core_type = #tpu.core_type<tc>, window_params = [{transform_indices = @transform_0, window_bounds = array<i64: 8, 128>}, {transform_indices = @transform_1, window_bounds = array<i64: 128, 128>}, {transform_indices = @transform_2, window_bounds = array<i64: 1, 128>}, {transform_indices = @transform_3, window_bounds = array<i64: 8, 128>}]} {
    %c0 = arith.constant 0 : index
    %c0_0 = arith.constant 0 : index
    %0 = vector.load %arg2[%c0, %c0_0] : memref<8x128xf32, #tpu.memory_space<vmem>>, vector<8x128xf32>
    %c0_1 = arith.constant 0 : index
    %c0_2 = arith.constant 0 : index
    %1 = vector.load %arg3[%c0_1, %c0_2] : memref<128x128xf32, #tpu.memory_space<vmem>>, vector<128x128xf32>
    %cst = arith.constant dense<0.000000e+00> : vector<8x128xf32>
    %2 = tpu.matmul %0, %1, %cst {dimension_numbers = #tpu.dot_dimension_numbers<[1], [0], [0], [1], [0, 0, 1, 1], [], []>} : vector<8x128xf32>, vector<128x128xf32>, vector<8x128xf32> -> vector<8x128xf32>
    %c0_3 = arith.constant 0 : index
    %c0_4 = arith.constant 0 : index
    %3 = vector.load %arg4[%c0_3, %c0_4] : memref<1x128xf32, #tpu.memory_space<vmem>>, vector<1x128xf32>
    %4 = vector.broadcast %3 : vector<1x128xf32> to vector<8x128xf32>
    %5 = arith.addf %2, %4 : vector<8x128xf32>
    %6 = math.tanh %5 : vector<8x128xf32>
    %c0_5 = arith.constant 0 : index
    %c0_6 = arith.constant 0 : index
    %7 = vector.load %arg5[%c0_5, %c0_6] : memref<8x128xf32, #tpu.memory_space<vmem>>, vector<8x128xf32>
    tpu.vector_store %arg5[%c0_5, %c0_6], %6 {strides = array<i32>} : memref<8x128xf32, #tpu.memory_space<vmem>>, vector<8x128xf32>,
    return
  }
  func.func @transform_0(%arg0: i32, %arg1: i32) -> (i32, i32) {
    %c0_i32 = arith.constant 0 : i32
    %c0_i32_0 = arith.constant 0 : i32
    return %arg0, %c0_i32 : i32, i32
  }
  func.func @transform_1(%arg0: i32, %arg1: i32) -> (i32, i32) {
    %c0_i32 = arith.constant 0 : i32
    %c0_i32_0 = arith.constant 0 : i32
    return %c0_i32, %arg1 : i32, i32
  }
  func.func @transform_2(%arg0: i32, %arg1: i32) -> (i32, i32) {
    %c0_i32 = arith.constant 0 : i32
    %c0_i32_0 = arith.constant 0 : i32
    return %c0_i32, %arg1 : i32, i32
  }
  func.func @transform_3(%arg0: i32, %arg1: i32) -> (i32, i32) {
    %c0_i32 = arith.constant 0 : i32
    return %arg0, %arg1 : i32, i32
  }
}

</mosaic_0001>

<llo_original>
// kernel: forward.1
$region0: #{forward.1}
  #allocation0 [shape = 'u32[]', space=smem, size = 0x4, offset = 0x4, fixed_abs, tag = 'smem constant byte address 0x4 - core index']
  #allocation1 [shape = 'u32[144,128]{1,0:T(1,128)}', space=vmem, size = 0x12000, scoped, tag = 'internal scratch']
  %s0 = inlined_call_operand.vmem [shape: f32[8,128], index: 0, kind: input, shape index: {}]
  %s1 = inlined_call_operand.hbm [shape: f32[128,128], index: 1, kind: input, shape index: {}]
  %s2 = inlined_call_operand.vmem [shape: f32[1,128], index: 2, kind: input, shape index: {}]
  %s3 = inlined_call_operand.hbm [shape: f32[8,128], index: 3, kind: output, shape index: {}]
  %s4 = sld [smem:[#allocation0]]
  $region26: #{forward.1} parent=0
    _
  %s6 = ssub.s32 1, %s4
  %s7 = scalar_select 0, %s6, %s4
  $region1: #{forward.1} parent=0
    #allocation2 [shape = 'u8[65536]{0}', space=vmem, size = 0x10000, scoped, tag = 'input window, operand 1, single buffered']
    #allocation3 [shape = 's32[1]{0}', space=sflag, size = 0x4, scoped, tag = 'scoped memory for forward.1']
    #allocation4 [shape = 's32[1]{0}', space=sflag, size = 0x4, scoped, tag = 'scoped memory for forward.1']
    #allocation5 [shape = 'u8[4096]{0}', space=vmem, size = 0x1000, scoped, tag = 'output window, operand 0, single buffered']
    %8 = vsyncpa [#allocation3], 0
    %9 = vsyncpa [#allocation4], 0
    // Predicated region
    $region2: #{forward.1} parent=1 // pred_check
      _
    $region3: #{forward.1} parent=1 // pred_check_branch
      %11 = sbr.rel (0) target = $region5
    $region4: #{forward.1} parent=1 // pred_region
      _
    $region5: #{forward.1} parent=1 // pred_fallthru
      _
    // Predicated region
    $region6: #{forward.1} parent=1 // pred_check
      _
    $region7: #{forward.1} parent=1 // pred_check_branch
      %13 = sbr.rel (0) target = $region9
    $region8: #{forward.1} parent=1 // pred_region
      %s15 = ssub.s32 2048, 2048
      %16 = vsyncadd [#allocation3], %s15
      %s17 = sshll.u32 [#allocation2], 4
      %s18 = int_to_ptr.vmem [resolvable:$true] %s17
      %23 = dma.hbm_to_vmem [thread:$0]  %s1, 2048, %s18, [#allocation3], 128, 128, 8
    $region9: #{forward.1} parent=1 // pred_fallthru
      _
    // Predicated region
    $region10: #{forward.1} parent=1 // pred_check
      _
    $region11: #{forward.1} parent=1 // pred_check_branch
      %25 = sbr.rel (0) target = $region13
    $region12: #{forward.1} parent=1 // pred_region
      _
    $region13: #{forward.1} parent=1 // pred_fallthru
      _
    // Predicated region
    $region14: #{forward.1} parent=1 // pred_check
      _
    $region15: #{forward.1} parent=1 // pred_check_branch
      %27 = sbr.rel (0) target = $region17
    $region16: #{forward.1} parent=1 // pred_region
      %28 = dma.done [#allocation3], 2048
    $region17: #{forward.1} parent=1 // pred_fallthru
      _
    %v29 = vld [vmem:[%s0] sm:$0xff]
    %v30 = vld [vmem:[#allocation2] sm:$0xff]
    %v31 = vld [vmem:[#allocation2 + $0x8] sm:$0xff]
    %v32 = vld [vmem:[#allocation2 + $0x10] sm:$0xff]
    %v33 = vld [vmem:[#allocation2 + $0x18] sm:$0xff]
    %v34 = vld [vmem:[#allocation2 + $0x20] sm:$0xff]
    %v35 = vld [vmem:[#allocation2 + $0x28] sm:$0xff]
    %v36 = vld [vmem:[#allocation2 + $0x30] sm:$0xff]
    %v37 = vld [vmem:[#allocation2 + $0x38] sm:$0xff]
    %v38 = vld [vmem:[#allocation2 + $0x40] sm:$0xff]
    %v39 = vld [vmem:[#allocation2 + $0x48] sm:$0xff]
    %v40 = vld [vmem:[#allocation2 + $0x50] sm:$0xff]
    %v41 = vld [vmem:[#allocation2 + $0x58] sm:$0xff]
    %v42 = vld [vmem:[#allocation2 + $0x60] sm:$0xff]
    %v43 = vld [vmem:[#allocation2 + $0x68] sm:$0xff]
    %v44 = vld [vmem:[#allocation2 + $0x70] sm:$0xff]
    %v45 = vld [vmem:[#allocation2 + $0x78] sm:$0xff]
    %v46 = vld [vmem:[%s2] sm:$0x1]
    %v48 = vlaneseq
    %v49 = vshrl.u32 %v48, 7
    %v50 = vsub.s32 0, %v49
    %v51 = vrot.slane %v46, %v50
    %53 = vmatprep.subr.mxu0 0.0
    %54 = vmatpush1.msra.mxu0 %v30
    %55 = vmatprep.subr.mxu0 0.0
    %56 = vmatpush1.msra.mxu0 %v31
    %57 = vmatprep.subr.mxu0 0.0
    %58 = vmatpush1.msra.mxu0 %v32
    %59 = vmatprep.subr.mxu0 0.0
    %60 = vmatpush1.msra.mxu0 %v33
    %61 = vmatprep.subr.mxu0 0.0
    %62 = vmatpush1.msra.mxu0 %v34
    %63 = vmatprep.subr.mxu0 0.0
    %64 = vmatpush1.msra.mxu0 %v35
    %65 = vmatprep.subr.mxu0 0.0
    %66 = vmatpush1.msra.mxu0 %v36
    %67 = vmatprep.subr.mxu0 0.0
    %68 = vmatpush1.msra.mxu0 %v37
    %69 = vmatprep.subr.mxu0 0.0
    %70 = vmatpush1.msra.mxu0 %v38
    %71 = vmatprep.subr.mxu0 0.0
    %72 = vmatpush1.msra.mxu0 %v39
    %73 = vmatprep.subr.mxu0 0.0
    %74 = vmatpush1.msra.mxu0 %v40
    %75 = vmatprep.subr.mxu0 0.0
    %76 = vmatpush1.msra.mxu0 %v41
    %77 = vmatprep.subr.mxu0 0.0
    %78 = vmatpush1.msra.mxu0 %v42
    %79 = vmatprep.subr.mxu0 0.0
    %80 = vmatpush1.msra.mxu0 %v43
    %81 = vmatprep.subr.mxu0 0.0
    %82 = vmatpush1.msra.mxu0 %v44
    %83 = vmatprep.subr.mxu0 0.0
    %84 = vmatpush1.msra.mxu0 %v45
    %85 = vmatprep.subr.mxu0 0.0
    %86 = vmatpush1.msra.mxu0 0.0
    %87 = vmatprep.subr.mxu0 0.0
    %88 = vmatpush1.msra.mxu0 0.0
    %89 = vmatprep.subr.mxu0 0.0
    %90 = vmatpush1.msra.mxu0 0.0
    %91 = vmatprep.subr.mxu0 0.0
    %92 = vmatpush1.msra.mxu0 0.0
    %93 = vmatprep.subr.mxu0 0.0
    %94 = vmatpush1.msra.mxu0 0.0
    %95 = vmatprep.subr.mxu0 0.0
    %96 = vmatpush1.msra.mxu0 0.0
    %97 = vmatprep.subr.mxu0 0.0
    %98 = vmatpush1.msra.mxu0 0.0
    %99 = vmatprep.subr.mxu0 0.0
    %100 = vmatpush1.msra.mxu0 0.0
    %101 = vmatprep.subr.mxu0 0.0
    %102 = vmatpush1.msra.mxu0 0.0
    %103 = vmatprep.subr.mxu0 0.0
    %104 = vmatpush1.msra.mxu0 0.0
    %105 = vmatprep.subr.mxu0 0.0
    %106 = vmatpush1.msra.mxu0 0.0
    %107 = vmatprep.subr.mxu0 0.0
    %108 = vmatpush1.msra.mxu0 0.0
    %109 = vmatprep.subr.mxu0 0.0
    %110 = vmatpush1.msra.mxu0 0.0
    %111 = vmatprep.subr.mxu0 0.0
    %112 = vmatpush1.msra.mxu0 0.0
    %113 = vmatprep.subr.mxu0 0.0
    %114 = vmatpush1.msra.mxu0 0.0
    %115 = vmatprep.subr.mxu0 0.0
    %116 = vmatpush1.msra.mxu0 0.0
    %117 = vmatprep.mubr.f32.mxu0 0.0
    %118 = vmatmul.mubr.f32.gmra.mrb[0].mxu0 %v29
    %v119 = vpop.f32.mrb[0].mxu0
    %v120 = vadd.f32 %v51, %v119
    %v121 = vpop.f32.mrb[0].mxu0
    %122 = vdwg.mxu0
    %v123 = vtanh.pop %v120
    %124 = vst [vmem:[#allocation5] sm:$0xff] %v123
    // Predicated region
    $region18: #{forward.1} parent=1 // pred_check
      _
    $region19: #{forward.1} parent=1 // pred_check_branch
      %126 = sbr.rel (0) target = $region21
    $region20: #{forward.1} parent=1 // pred_region
      %s128 = ssub.s32 128, 128
      %129 = vsyncadd [#allocation4], %s128
      %s131 = sshll.u32 [#allocation5], 4
      %s132 = int_to_ptr.vmem [resolvable:$true] %s131
      %134 = dma.vmem_to_hbm [thread:$0]  %s132, 128, %s3, [#allocation4]
    $region21: #{forward.1} parent=1 // pred_fallthru
      _
    // Predicated region
    $region22: #{forward.1} parent=1 // pred_check
      _
    $region23: #{forward.1} parent=1 // pred_check_branch
      %136 = sbr.rel (0) target = $region25
    $region24: #{forward.1} parent=1 // pred_region
      %137 = dma.done [#allocation4], 128
    $region25: #{forward.1} parent=1 // pred_fallthru
      _
    %138 = vsyncpa [#allocation3], 1
    %139 = vsyncpa [#allocation4], 1

</llo_original>
